<compile_context>
chip_gen: v5e
topology: v5e:2x2
jax: 0.10.0
libtpu: 0.0.40
codegen_flags: <defaults>
</compile_context>

<pallas_src>
import math

import jax
import jax.numpy as jnp
from jax.experimental import pallas as pl
from jax.experimental.pallas import tpu as pltpu


def _round_up(x, m):
    return ((x + m - 1) // m) * m


# ----------------------------- kernels --------------------------------------


def _fh_kernel_single_k(x_ref, w_ref, b_ref, o_ref):
    # x_ref: [tm, K]  w_ref: [K, tn]  b_ref: [1, tn]  o_ref: [tm, tn]
    acc = jnp.dot(x_ref[...], w_ref[...], preferred_element_type=jnp.float32)
    o_ref[...] = (acc + b_ref[...].astype(jnp.float32)).astype(o_ref.dtype)


def _fh_kernel_multi_k(x_ref, w_ref, b_ref, o_ref, acc_ref):
    # grid = (num_n, num_m, num_k); K innermost reduction axis.
    k = pl.program_id(2)

    @pl.when(k == 0)
    def _():
        acc_ref[...] = jnp.zeros_like(acc_ref)

    acc_ref[...] += jnp.dot(
        x_ref[...], w_ref[...], preferred_element_type=jnp.float32
    )

    @pl.when(k == pl.num_programs(2) - 1)
    def _():
        # Bias applied exactly once, in the epilogue of the K reduction.
        o_ref[...] = (acc_ref[...] + b_ref[...].astype(jnp.float32)).astype(
            o_ref.dtype
        )


# --------------------------- tile selection ----------------------------------


def _pick_tm(M, sub, cap=512):
    """Row-tile: prefer the full M (no pad, num_m == 1)."""
    if M <= cap:
        return M, M, 1
    for cand in range(cap - (cap % sub), sub - 1, -sub):
        if M % cand == 0:
            return cand, M, M // cand
    Mp = _round_up(M, cap)
    return cap, Mp, Mp // cap


def _pick_tk(K, cap=2048):
    """K-tile: prefer the full K (no pad, num_k == 1), else a /128 divisor."""
    if K <= cap:
        return K, K, 1
    for cand in range(cap, 127, -128):
        if K % cand == 0:
            return cand, K, K // cand
    Kp = _round_up(K, cap)
    return cap, Kp, Kp // cap


def _pick_tn(Np):
    """N-tile: lane-dense (multiple of 128); >=2 blocks when Np >= 256 so the
    second TensorCore on v7x gets work along a parallel axis."""
    if Np <= 128:
        return Np
    if Np % 256 == 0 and Np >= 512:
        return 256
    return 128


# ------------------------------ wrapper ---------------------------------------


def flatten_head_forward(x, weight, bias):
    """FlattenHead forward.

    x:      [B, n_vars, d_model, patch_num]
    weight: [nf, target_window]   (nf = d_model * patch_num)
    bias:   [target_window]

    Pass bf16 weight/x (cast ONCE at parameter level) to stream operands in
    bf16; accumulation stays f32 inside the kernel.
    """
    B, n_vars, d_model, patch_num = x.shape
    nf = d_model * patch_num
    assert weight.shape[0] == nf
    tw = weight.shape[1]

    M, K, N = B * n_vars, nf, tw
    out_dtype = x.dtype

    # --- glue: flatten(-2) and fold (B, n_vars) into rows --------------------
    x2d = x.reshape(M, K)
    w2d = weight
    b2d = bias.reshape(1, N)

    # Lane-dense output: pad only the weight/bias N-columns (cheap) to /128.
    Np = _round_up(N, 128)
    if Np != N:
        w2d = jnp.pad(w2d, ((0, 0), (0, Np - N)))
        b2d = jnp.pad(b2d, ((0, 0), (0, Np - N)))

    # --- tile sizes -----------------------------------------------------------
    sub = {1: 32, 2: 16, 4: 8}.get(jnp.dtype(x2d.dtype).itemsize, 8)
    tm, Mp, num_m = _pick_tm(M, sub)
    tk, Kp, num_k = _pick_tk(K)
    tn = _pick_tn(Np)
    num_n = Np // tn

    # Rare fallbacks only (big M / awkward K): zero-pad so every tile is full.
    if Mp != M:
        x2d = jnp.pad(x2d, ((0, Mp - M), (0, 0)))
    if Kp != K:
        x2d = jnp.pad(x2d, ((0, 0), (0, Kp - K)))
        w2d = jnp.pad(w2d, ((0, Kp - K), (0, 0)))

    # --- scheduler hints ------------------------------------------------------
    bytes_accessed = (
        int(x2d.size) * x2d.dtype.itemsize
        + int(w2d.size) * w2d.dtype.itemsize
        + int(b2d.size) * b2d.dtype.itemsize
        + Mp * Np * jnp.dtype(out_dtype).itemsize
    )
    cost = pl.CostEstimate(
        flops=2 * M * K * N, transcendentals=0, bytes_accessed=bytes_accessed
    )

    blk_bytes = (
        tm * tk * x2d.dtype.itemsize
        + tk * tn * w2d.dtype.itemsize
        + 8 * tn * b2d.dtype.itemsize
        + tm * tn * jnp.dtype(out_dtype).itemsize
    )
    need = 2 * blk_bytes + (tm * tn * 4 if num_k > 1 else 0)
    vmem_limit = int(min(max(need + (4 << 20), 32 << 20), 64 << 20))

    # --- grid / specs ---------------------------------------------------------
    if num_k == 1:
        # Common ReProTS case: K fits one tile -> direct dot, no accumulator.
        grid = (num_n, num_m)
        in_specs = [
            pl.BlockSpec((tm, K), lambda j, i: (i, 0)),
            pl.BlockSpec((K, tn), lambda j, i: (0, j)),   # const over inner i
            pl.BlockSpec((1, tn), lambda j, i: (0, j)),
        ]
        out_spec = pl.BlockSpec((tm, tn), lambda j, i: (i, j))
        scratch = []
        kernel = _fh_kernel_single_k
        dims = ("parallel", "parallel")
    else:
        grid = (num_n, num_m, num_k)
        in_specs = [
            pl.BlockSpec((tm, tk), lambda j, i, k: (i, k)),
            pl.BlockSpec((tk, tn), lambda j, i, k: (k, j)),
            pl.BlockSpec((1, tn), lambda j, i, k: (0, j)),
        ]
        out_spec = pl.BlockSpec((tm, tn), lambda j, i, k: (i, j))
        scratch = [pltpu.VMEM((tm, tn), jnp.float32)]
        kernel = _fh_kernel_multi_k
        dims = ("parallel", "parallel", "arbitrary")

    out = pl.pallas_call(
        kernel,
        out_shape=jax.ShapeDtypeStruct((Mp, Np), out_dtype),
        grid=grid,
        in_specs=in_specs,
        out_specs=out_spec,
        scratch_shapes=scratch,
        compiler_params=pltpu.CompilerParams(
            dimension_semantics=dims,
            vmem_limit_bytes=vmem_limit,
        ),
        cost_estimate=cost,
    )(x2d, w2d, b2d)

    # Dropout with head_dropout=0 (eval mode) is the identity.
    return out[:M, :N].reshape(B, n_vars, N)


# ------------------------------- demo ----------------------------------------

if __name__ == "__main__":
    fwd = jax.jit(flatten_head_forward)

    # ---- test 1: small shapes (single-K fast path) --------------------------
    #   B=2, n_vars=4, d_model=16, patch_num=8 -> nf=128, target_window=32
    B, n_vars, d_model, patch_num = 2, 4, 16, 8
    nf = d_model * patch_num
    target_window = 32

    key = jax.random.PRNGKey(0)
    kx, kw, kb, kx2, kw2, kb2 = jax.random.split(key, 6)

    x = jax.random.normal(kx, (B, n_vars, d_model, patch_num), dtype=jnp.float32)
    bound = 1.0 / math.sqrt(nf)
    weight = jax.random.uniform(kw, (nf, target_window), jnp.float32, -bound, bound)
    bias = jax.random.uniform(kb, (target_window,), jnp.float32, -bound, bound)

    out = jax.block_until_ready(fwd(x, weight, bias))
    ref = x.reshape(B, n_vars, nf) @ weight + bias
    assert out.shape == (B, n_vars, target_window)
    assert jnp.allclose(out, ref, atol=1e-4, rtol=1e-4)

    # ---- test 2: multi-K reduction + N-parallel axis -------------------------
    #   d_model=64, patch_num=40 -> nf=2560 (num_k=2), target_window=200 (num_n=2)
    d2, p2, tw2 = 64, 40, 200
    nf2 = d2 * p2
    x2 = jax.random.normal(kx2, (B, n_vars, d2, p2), dtype=jnp.float32)
    bound2 = 1.0 / math.sqrt(nf2)
    weight2 = jax.random.uniform(kw2, (nf2, tw2), jnp.float32, -bound2, bound2)
    bias2 = jax.random.uniform(kb2, (tw2,), jnp.float32, -bound2, bound2)

    out2 = jax.block_until_ready(fwd(x2, weight2, bias2))
    ref2 = x2.reshape(B, n_vars, nf2) @ weight2 + bias2
    assert out2.shape == (B, n_vars, tw2)
    assert jnp.allclose(out2, ref2, atol=1e-3, rtol=1e-3)

    # ---- test 3: bf16 operand streaming (params cast ONCE, outside the call) -
    x_bf16 = x.astype(jnp.bfloat16)            # done once at parameter/activation prep,
    weight_bf16 = weight.astype(jnp.bfloat16)  # not per-forward inside the wrapper
    out_bf16 = jax.block_until_ready(fwd(x_bf16, weight_bf16, bias))
    assert out_bf16.shape == (B, n_vars, target_window)
    assert bool(jnp.all(jnp.isfinite(out_bf16.astype(jnp.float32))))
    assert jnp.allclose(out_bf16.astype(jnp.float32), ref, atol=1.5e-1, rtol=1.5e-1)

    print("KERNEL_OK")
</pallas_src>

<mosaic_0001>
module attributes {stable_mosaic.version = 11 : i64} {
  func.func @_fh_kernel_single_k(%arg0: i32, %arg1: i32, %arg2: memref<8x128xf32, #tpu.memory_space<vmem>>, %arg3: memref<128x128xf32, #tpu.memory_space<vmem>>, %arg4: memref<1x128xf32, #tpu.memory_space<vmem>>, %arg5: memref<8x128xf32, #tpu.memory_space<vmem>>) attributes {dimension_semantics = [#tpu.dimension_semantics<parallel>, #tpu.dimension_semantics<parallel>], iteration_bounds = array<i64: 1, 1>, scalar_prefetch = 0 : i64, scratch_operands = 0 : i64, tpu.core_type = #tpu.core_type<tc>, window_params = [{transform_indices = @transform_0, window_bounds = array<i64: 8, 128>}, {transform_indices = @transform_1, window_bounds = array<i64: 128, 128>}, {transform_indices = @transform_2, window_bounds = array<i64: 1, 128>}, {transform_indices = @transform_3, window_bounds = array<i64: 8, 128>}]} {
    %c0 = arith.constant 0 : index
    %c0_0 = arith.constant 0 : index
    %0 = vector.load %arg2[%c0, %c0_0] : memref<8x128xf32, #tpu.memory_space<vmem>>, vector<8x128xf32>
    %c0_1 = arith.constant 0 : index
    %c0_2 = arith.constant 0 : index
    %1 = vector.load %arg3[%c0_1, %c0_2] : memref<128x128xf32, #tpu.memory_space<vmem>>, vector<128x128xf32>
    %cst = arith.constant dense<0.000000e+00> : vector<8x128xf32>
    %2 = tpu.matmul %0, %1, %cst {dimension_numbers = #tpu.dot_dimension_numbers<[1], [0], [0], [1], [0, 0, 1, 1], [], []>} : vector<8x128xf32>, vector<128x128xf32>, vector<8x128xf32> -> vector<8x128xf32>
    %c0_3 = arith.constant 0 : index
    %c0_4 = arith.constant 0 : index
    %3 = vector.load %arg4[%c0_3, %c0_4] : memref<1x128xf32, #tpu.memory_space<vmem>>, vector<1x128xf32>
    %4 = vector.broadcast %3 : vector<1x128xf32> to vector<8x128xf32>
    %5 = arith.addf %2, %4 : vector<8x128xf32>
    %c0_5 = arith.constant 0 : index
    %c0_6 = arith.constant 0 : index
    %6 = vector.load %arg5[%c0_5, %c0_6] : memref<8x128xf32, #tpu.memory_space<vmem>>, vector<8x128xf32>
    tpu.vector_store %arg5[%c0_5, %c0_6], %5 {strides = array<i32>} : memref<8x128xf32, #tpu.memory_space<vmem>>, vector<8x128xf32>,
    return
  }
  func.func @transform_0(%arg0: i32, %arg1: i32) -> (i32, i32) {
    %c0_i32 = arith.constant 0 : i32
    %c0_i32_0 = arith.constant 0 : i32
    return %arg1, %c0_i32 : i32, i32
  }
  func.func @transform_1(%arg0: i32, %arg1: i32) -> (i32, i32) {
    %c0_i32 = arith.constant 0 : i32
    %c0_i32_0 = arith.constant 0 : i32
    return %c0_i32, %arg0 : i32, i32
  }
  func.func @transform_2(%arg0: i32, %arg1: i32) -> (i32, i32) {
    %c0_i32 = arith.constant 0 : i32
    %c0_i32_0 = arith.constant 0 : i32
    return %c0_i32, %arg0 : i32, i32
  }
  func.func @transform_3(%arg0: i32, %arg1: i32) -> (i32, i32) {
    %c0_i32 = arith.constant 0 : i32
    return %arg1, %arg0 : i32, i32
  }
}

</mosaic_0001>

<llo_original>
// kernel: flatten_head_forward.1
$region0: #{flatten_head_forward.1}
  #allocation0 [shape = 'u32[]', space=smem, size = 0x4, offset = 0x4, fixed_abs, tag = 'smem constant byte address 0x4 - core index']
  #allocation1 [shape = 'u32[72,128]{1,0:T(1,128)}', space=vmem, size = 0x9000, scoped, tag = 'internal scratch']
  %s0 = inlined_call_operand.vmem [shape: f32[8,128], index: 0, kind: input, shape index: {}]
  %s1 = inlined_call_operand.vmem [shape: f32[128,128], index: 1, kind: input, shape index: {}]
  %s2 = inlined_call_operand.vmem [shape: f32[1,128], index: 2, kind: input, shape index: {}]
  %s3 = inlined_call_operand.hbm [shape: f32[8,128], index: 3, kind: output, shape index: {}]
  %s4 = sld [smem:[#allocation0]]
  $region22: #{flatten_head_forward.1} parent=0
    _
  %s6 = ssub.s32 1, %s4
  %s7 = scalar_select 0, %s6, %s4
  $region1: #{flatten_head_forward.1} parent=0
    #allocation2 [shape = 'u8[4096]{0}', space=vmem, size = 0x1000, scoped, tag = 'output window, operand 0, single buffered']
    #allocation3 [shape = 's32[1]{0}', space=sflag, size = 0x4, scoped, tag = 'scoped memory for flatten_head_forward.1']
    %8 = vsyncpa [#allocation3], 0
    // Predicated region
    $region2: #{flatten_head_forward.1} parent=1 // pred_check
      _
    $region3: #{flatten_head_forward.1} parent=1 // pred_check_branch
      %10 = sbr.rel (0) target = $region5
    $region4: #{flatten_head_forward.1} parent=1 // pred_region
      _
    $region5: #{flatten_head_forward.1} parent=1 // pred_fallthru
      _
    // Predicated region
    $region6: #{flatten_head_forward.1} parent=1 // pred_check
      _
    $region7: #{flatten_head_forward.1} parent=1 // pred_check_branch
      %12 = sbr.rel (0) target = $region9
    $region8: #{flatten_head_forward.1} parent=1 // pred_region
      _
    $region9: #{flatten_head_forward.1} parent=1 // pred_fallthru
      _
    // Predicated region
    $region10: #{flatten_head_forward.1} parent=1 // pred_check
      _
    $region11: #{flatten_head_forward.1} parent=1 // pred_check_branch
      %14 = sbr.rel (0) target = $region13
    $region12: #{flatten_head_forward.1} parent=1 // pred_region
      _
    $region13: #{flatten_head_forward.1} parent=1 // pred_fallthru
      _
    %v15 = vld [vmem:[%s0] sm:$0xff]
    %v16 = vld [vmem:[%s1] sm:$0xff]
    %v17 = vld [vmem:[%s1 + $0x8] sm:$0xff]
    %v18 = vld [vmem:[%s1 + $0x10] sm:$0xff]
    %v19 = vld [vmem:[%s1 + $0x18] sm:$0xff]
    %v20 = vld [vmem:[%s1 + $0x20] sm:$0xff]
    %v21 = vld [vmem:[%s1 + $0x28] sm:$0xff]
    %v22 = vld [vmem:[%s1 + $0x30] sm:$0xff]
    %v23 = vld [vmem:[%s1 + $0x38] sm:$0xff]
    %v24 = vld [vmem:[%s1 + $0x40] sm:$0xff]
    %v25 = vld [vmem:[%s1 + $0x48] sm:$0xff]
    %v26 = vld [vmem:[%s1 + $0x50] sm:$0xff]
    %v27 = vld [vmem:[%s1 + $0x58] sm:$0xff]
    %v28 = vld [vmem:[%s1 + $0x60] sm:$0xff]
    %v29 = vld [vmem:[%s1 + $0x68] sm:$0xff]
    %v30 = vld [vmem:[%s1 + $0x70] sm:$0xff]
    %v31 = vld [vmem:[%s1 + $0x78] sm:$0xff]
    %v32 = vld [vmem:[%s2] sm:$0x1]
    %v34 = vperm.slane %v32, 0
    %36 = vmatpush.msra.mxu0 %v31
    %37 = vmatpush.msra.mxu0 %v30
    %38 = vmatpush.msra.mxu0 %v29
    %39 = vmatpush.msra.mxu0 %v28
    %40 = vmatpush.msra.mxu0 %v27
    %41 = vmatpush.msra.mxu0 %v26
    %42 = vmatpush.msra.mxu0 %v25
    %43 = vmatpush.msra.mxu0 %v24
    %44 = vmatpush.msra.mxu0 %v23
    %45 = vmatpush.msra.mxu0 %v22
    %46 = vmatpush.msra.mxu0 %v21
    %47 = vmatpush.msra.mxu0 %v20
    %48 = vmatpush.msra.mxu0 %v19
    %49 = vmatpush.msra.mxu0 %v18
    %50 = vmatpush.msra.mxu0 %v17
    %51 = vmatpush.msra.mxu0 %v16
    %52 = vmatmul.f32.gmra.mxu0 %v15
    %v53 = vpop.f32.mrf.mxu0
    %v54 = vadd.f32 %v34, %v53
    %55 = vdwg.mxu0
    %56 = vst [vmem:[#allocation2] sm:$0xff] %v54
    // Predicated region
    $region14: #{flatten_head_forward.1} parent=1 // pred_check
      _
    $region15: #{flatten_head_forward.1} parent=1 // pred_check_branch
      %58 = sbr.rel (0) target = $region17
    $region16: #{flatten_head_forward.1} parent=1 // pred_region
      %60 = vsyncadd [#allocation3], 0
      %s62 = sshll.u32 [#allocation2], 4
      %s63 = int_to_ptr.vmem [resolvable:$true] %s62
      %s64 = sshll.u32 %s3, 4
      %s65 = int_to_ptr.hbm [resolvable:$true] %s64
      %67 = dma.vmem_to_hbm [thread:$0]  %s63, 128, %s65, [#allocation3]
    $region17: #{flatten_head_forward.1} parent=1 // pred_fallthru
      _
    // Predicated region
    $region18: #{flatten_head_forward.1} parent=1 // pred_check
      _
    $region19: #{flatten_head_forward.1} parent=1 // pred_check_branch
      %69 = sbr.rel (0) target = $region21
    $region20: #{flatten_head_forward.1} parent=1 // pred_region
      %71 = dma.done [#allocation3], 128
    $region21: #{flatten_head_forward.1} parent=1 // pred_fallthru
      _
    %72 = vsyncpa [#allocation3], 1

</llo_original>
